<compile_context>
chip_gen: v5e
topology: v5e:2x2
jax: 0.10.0
libtpu: 0.0.40
codegen_flags: <defaults>
</compile_context>

<pallas_src>
import functools

import jax
import jax.numpy as jnp
from jax.experimental import pallas as pl
from jax.experimental.pallas import tpu as pltpu


def _round_up(a, b):
    return (a + b - 1) // b * b


def _partial_conv_kernel(x_ref, m_ref, w_ref, b_ref, out_ref, newmask_ref,
                         rhs_ref, *, K, NB, L, L_out, L_out_pad, use_bf16):
    # x_ref, m_ref : (NB, C, L)        unpadded input tiles
    # w_ref        : (O, K*C)          im2col weight, row order k*C + c
    # b_ref        : (O, 1)            bias
    # out_ref      : (NB, O, L_out)    true L_out (masked vst only on last tile)
    # newmask_ref  : (NB, 1, L_out)    single-row new mask
    # rhs_ref      : VMEM scratch (K*C, NB*L_out_pad), im2col RHS
    C = x_ref.shape[1]
    L_in_pad = L_out_pad + K - 1
    pad = L_in_pad - L                      # VMEM-only lane padding

    w = w_ref[...]                          # (O, K*C)
    b = b_ref[...]                          # (O, 1)

    # ---- build the im2col RHS directly in the VMEM scratch -----------------
    for n in range(NB):
        xm_n = x_ref[n] * m_ref[n]          # (C, L)  masked input (VPU)
        for k in range(K):
            valid = min(L_out_pad, L - k)   # static; columns >= L_out of each
            # block are never stored to HBM, so the scratch tail can keep
            # stale data without affecting results.
            rhs_ref[pl.ds(k * C, C), pl.ds(n * L_out_pad, valid)] = (
                xm_n[:, k:k + valid].astype(rhs_ref.dtype))

    lhs = w.astype(rhs_ref.dtype) if use_bf16 else w
    acc = jnp.dot(lhs, rhs_ref[...], preferred_element_type=jnp.float32)
    # acc : (O, NB * L_out_pad) -- bias-free conv(x * m)

    # ---- per-sample epilogue: mask count, holes, renormalization -----------
    for n in range(NB):
        # ones-weight mask conv = one cross-sublane reduce + K shifted row adds
        colsum = jnp.sum(m_ref[n], axis=0, keepdims=True)          # (1, L)
        if pad > 0:
            colsum = jnp.concatenate(
                [colsum, jnp.zeros((1, pad), jnp.float32)], axis=-1)
        mrow = colsum[:, 0:L_out_pad]
        for k in range(1, K):
            mrow = mrow + colsum[:, k:k + L_out_pad]                # (1, L_out_pad)

        holes = mrow == 0.0
        # exact reciprocal of a small integer count on a single row
        inv = pl.reciprocal(jnp.where(holes, 1.0, mrow))

        acc_n = acc[:, n * L_out_pad:(n + 1) * L_out_pad]           # (O, L_out_pad)
        out_n = jnp.where(holes, 0.0, acc_n * inv + b)
        newm_n = jnp.where(holes, 0.0, 1.0)                         # (1, L_out_pad)

        out_ref[n] = out_n[:, :L_out].astype(out_ref.dtype)
        newmask_ref[n] = newm_n[:, :L_out].astype(newmask_ref.dtype)


def partial_conv(x, mask, weight, bias, *, nb=None, use_bf16_matmul=False,
                 core_parallel=False):
    N, C, L = x.shape
    O, Cw, K = weight.shape
    assert Cw == C and mask.shape == (N, C, L)
    L_out = L - K + 1
    assert L_out >= 1

    L_out_pad = _round_up(L_out, 128)
    rhs_itemsize = 2 if use_bf16_matmul else 4

    if nb is None:
        # Small batch block (<= 4) that divides N, keeps the grid deep enough
        # for the auto-pipeline, and fits the per-step VMEM budget (blocks are
        # double-buffered; the im2col scratch, f32 accumulator and shifted
        # slice temporaries are counted too).
        nb = min(4, max(1, -(-N // 8)), N)

        def step_vmem_bytes(b_):
            blocks = 2 * 2 * b_ * C * L * 4                  # x + mask, 2-buffered
            blocks += 2 * b_ * (O + 1) * L_out * 4           # out + new_mask, 2-buffered
            rhs = K * C * b_ * L_out_pad * rhs_itemsize      # im2col scratch
            acc = O * b_ * L_out_pad * 4                     # f32 accumulator
            temps = b_ * C * L_out_pad * 4                   # shifted-slice temps
            return blocks + rhs + acc + temps

        while nb > 1 and (N % nb != 0 or step_vmem_bytes(nb) > (20 << 20)):
            nb -= 1
    assert N % nb == 0, "nb must divide the batch size N"

    # im2col weight: row order k*C + c (matches the scratch layout in-kernel).
    w2 = jnp.transpose(weight, (0, 2, 1)).reshape(O, K * C)
    b2 = bias.reshape(O, 1)

    kernel = functools.partial(
        _partial_conv_kernel, K=K, NB=nb, L=L, L_out=L_out,
        L_out_pad=L_out_pad, use_bf16=use_bf16_matmul)

    rhs_dtype = jnp.bfloat16 if use_bf16_matmul else jnp.float32
    batch_sem = pltpu.CORE_PARALLEL if core_parallel else "parallel"

    out, new_mask_row = pl.pallas_call(
        kernel,
        out_shape=(
            jax.ShapeDtypeStruct((N, O, L_out), jnp.float32),
            jax.ShapeDtypeStruct((N, 1, L_out), jnp.float32),
        ),
        grid_spec=pltpu.PrefetchScalarGridSpec(
            num_scalar_prefetch=0,
            grid=(N // nb,),
            in_specs=[
                pl.BlockSpec((nb, C, L), lambda i: (i, 0, 0)),      # x
                pl.BlockSpec((nb, C, L), lambda i: (i, 0, 0)),      # mask
                pl.BlockSpec((O, K * C), lambda i: (0, 0)),         # weight
                pl.BlockSpec((O, 1), lambda i: (0, 0)),             # bias
            ],
            out_specs=[
                pl.BlockSpec((nb, O, L_out), lambda i: (i, 0, 0)),
                pl.BlockSpec((nb, 1, L_out), lambda i: (i, 0, 0)),
            ],
            scratch_shapes=[pltpu.VMEM((K * C, nb * L_out_pad), rhs_dtype)],
        ),
        compiler_params=pltpu.CompilerParams(
            dimension_semantics=(batch_sem,),
            vmem_limit_bytes=40 * 1024 * 1024),
    )(x, mask, w2, b2)

    # new_mask is identical across output channels: broadcast lazily here
    # instead of writing O copies from the kernel.
    return out, jnp.broadcast_to(new_mask_row, out.shape)


def partial_conv_ref(x, mask, weight, bias):
    """Pure-JAX reference mirroring the PyTorch forward."""
    dn = ("NCH", "OIH", "NCH")
    out = jax.lax.conv_general_dilated(x * mask, weight, (1,), "VALID",
                                       dimension_numbers=dn) + bias.reshape(1, -1, 1)
    ones_w = jnp.ones_like(weight)
    out_mask = jax.lax.conv_general_dilated(mask, ones_w, (1,), "VALID",
                                            dimension_numbers=dn)
    holes = out_mask == 0.0
    mask_sum = jnp.where(holes, 1.0, out_mask)
    b = bias.reshape(1, -1, 1)
    output_pre = (out - b) / mask_sum + b
    output = jnp.where(holes, 0.0, output_pre)
    new_mask = jnp.where(holes, 0.0, 1.0)
    return output, new_mask


if __name__ == "__main__":
    # Small shapes consistent with the module: Conv1d over (N, C, L).
    N, C_in, L = 2, 4, 16
    O, K = 8, 3

    key = jax.random.PRNGKey(0)
    kx, km, kw, kb = jax.random.split(key, 4)

    x = jax.random.normal(kx, (N, C_in, L), dtype=jnp.float32)
    # Binary mask with some holes (same channel count as the input).
    mask = (jax.random.uniform(km, (N, C_in, L)) > 0.4).astype(jnp.float32)
    # Zero out a full window in one sample so no_update_holes is exercised.
    mask = mask.at[0, :, 0:5].set(0.0)

    # Deterministic parameter init (shapes from nn.Conv1d(C_in, O, K)).
    bound = 1.0 / jnp.sqrt(jnp.float32(C_in * K))
    weight = jax.random.uniform(kw, (O, C_in, K), minval=-bound, maxval=bound,
                                dtype=jnp.float32)
    bias = jax.random.uniform(kb, (O,), minval=-bound, maxval=bound,
                              dtype=jnp.float32)

    out, new_mask = partial_conv(x, mask, weight, bias)
    jax.block_until_ready((out, new_mask))

    ref_out, ref_mask = partial_conv_ref(x, mask, weight, bias)
    assert out.shape == (N, O, L - K + 1) and new_mask.shape == out.shape
    assert jnp.allclose(out, ref_out, atol=1e-5, rtol=1e-5)
    assert jnp.allclose(new_mask, ref_mask)

    print("KERNEL_OK")
</pallas_src>

<mosaic_0001>
module attributes {stable_mosaic.version = 11 : i64} {
  func.func @_partial_conv_kernel(%arg0: i32, %arg1: memref<1x4x16xf32, #tpu.memory_space<vmem>>, %arg2: memref<1x4x16xf32, #tpu.memory_space<vmem>>, %arg3: memref<8x12xf32, #tpu.memory_space<vmem>>, %arg4: memref<8x1xf32, #tpu.memory_space<vmem>>, %arg5: memref<1x8x14xf32, #tpu.memory_space<vmem>>, %arg6: memref<1x1x14xf32, #tpu.memory_space<vmem>>, %arg7: memref<12x128xf32, #tpu.memory_space<vmem>>) attributes {dimension_semantics = [#tpu.dimension_semantics<parallel>], iteration_bounds = array<i64: 2>, scalar_prefetch = 0 : i64, scratch_operands = 1 : i64, tpu.core_type = #tpu.core_type<tc>, window_params = [{transform_indices = @transform_0, window_bounds = array<i64: 1, 4, 16>}, {transform_indices = @transform_1, window_bounds = array<i64: 1, 4, 16>}, {pipeline_mode = #tpu.pipeline_mode<synchronous>, transform_indices = @transform_2, window_bounds = array<i64: 8, 12>}, {pipeline_mode = #tpu.pipeline_mode<synchronous>, transform_indices = @transform_3, window_bounds = array<i64: 8, 1>}, {transform_indices = @transform_4, window_bounds = array<i64: 1, 8, 14>}, {transform_indices = @transform_5, window_bounds = array<i64: 1, 1, 14>}]} {
    %c0 = arith.constant 0 : index
    %c0_0 = arith.constant 0 : index
    %0 = vector.load %arg3[%c0, %c0_0] : memref<8x12xf32, #tpu.memory_space<vmem>>, vector<8x12xf32>
    %c0_1 = arith.constant 0 : index
    %c0_2 = arith.constant 0 : index
    %1 = vector.load %arg4[%c0_1, %c0_2] : memref<8x1xf32, #tpu.memory_space<vmem>>, vector<8x1xf32>
    %c0_3 = arith.constant 0 : index
    %c0_4 = arith.constant 0 : index
    %c0_5 = arith.constant 0 : index
    %2 = vector.load %arg1[%c0_3, %c0_4, %c0_5] : memref<1x4x16xf32, #tpu.memory_space<vmem>>, vector<1x4x16xf32>
    %3 = vector.shape_cast %2 : vector<1x4x16xf32> to vector<4x16xf32>
    %c0_6 = arith.constant 0 : index
    %c0_7 = arith.constant 0 : index
    %c0_8 = arith.constant 0 : index
    %4 = vector.load %arg2[%c0_6, %c0_7, %c0_8] : memref<1x4x16xf32, #tpu.memory_space<vmem>>, vector<1x4x16xf32>
    %5 = vector.shape_cast %4 : vector<1x4x16xf32> to vector<4x16xf32>
    %6 = arith.mulf %3, %5 : vector<4x16xf32>
    %c0_9 = arith.constant 0 : index
    %c0_10 = arith.constant 0 : index
    %7 = vector.load %arg7[%c0_9, %c0_10] : memref<12x128xf32, #tpu.memory_space<vmem>>, vector<4x16xf32>
    tpu.vector_store %arg7[%c0_9, %c0_10], %6 {strides = array<i32>} : memref<12x128xf32, #tpu.memory_space<vmem>>, vector<4x16xf32>,
    %8 = vector.extract_strided_slice %6 {offsets = [0, 1], sizes = [4, 15], strides = [1, 1]} : vector<4x16xf32> to vector<4x15xf32>
    %c4 = arith.constant 4 : index
    %c0_11 = arith.constant 0 : index
    %9 = vector.load %arg7[%c4, %c0_11] : memref<12x128xf32, #tpu.memory_space<vmem>>, vector<4x15xf32>
    tpu.vector_store %arg7[%c4, %c0_11], %8 {strides = array<i32>} : memref<12x128xf32, #tpu.memory_space<vmem>>, vector<4x15xf32>,
    %10 = vector.extract_strided_slice %6 {offsets = [0, 2], sizes = [4, 14], strides = [1, 1]} : vector<4x16xf32> to vector<4x14xf32>
    %c8 = arith.constant 8 : index
    %c0_12 = arith.constant 0 : index
    %11 = vector.load %arg7[%c8, %c0_12] : memref<12x128xf32, #tpu.memory_space<vmem>>, vector<4x14xf32>
    tpu.vector_store %arg7[%c8, %c0_12], %10 {strides = array<i32>} : memref<12x128xf32, #tpu.memory_space<vmem>>, vector<4x14xf32>,
    %c0_13 = arith.constant 0 : index
    %c0_14 = arith.constant 0 : index
    %12 = vector.load %arg7[%c0_13, %c0_14] : memref<12x128xf32, #tpu.memory_space<vmem>>, vector<12x128xf32>
    %cst = arith.constant dense<0.000000e+00> : vector<8x128xf32>
    %13 = tpu.matmul %0, %12, %cst {dimension_numbers = #tpu.dot_dimension_numbers<[1], [0], [0], [1], [0, 0, 1, 1], [], []>} : vector<8x12xf32>, vector<12x128xf32>, vector<8x128xf32> -> vector<8x128xf32>
    %c0_15 = arith.constant 0 : index
    %c0_16 = arith.constant 0 : index
    %c0_17 = arith.constant 0 : index
    %14 = vector.load %arg2[%c0_15, %c0_16, %c0_17] : memref<1x4x16xf32, #tpu.memory_space<vmem>>, vector<1x4x16xf32>
    %15 = vector.shape_cast %14 : vector<1x4x16xf32> to vector<4x16xf32>
    %cst_18 = arith.constant dense<0.000000e+00> : vector<16xf32>
    %16 = vector.multi_reduction <add>, %15, %cst_18 [0] : vector<4x16xf32> to vector<16xf32>
    %17 = vector.shape_cast %16 : vector<16xf32> to vector<1x16xf32>
    %cst_19 = arith.constant 0.000000e+00 : f32
    %18 = vector.broadcast %cst_19 : f32 to vector<1x114xf32>
    %19 = tpu.concatenate %17, %18 in 1 : vector<1x16xf32>, vector<1x114xf32> -> vector<1x130xf32>
    %20 = vector.extract_strided_slice %19 {offsets = [0, 0], sizes = [1, 128], strides = [1, 1]} : vector<1x130xf32> to vector<1x128xf32>
    %21 = vector.extract_strided_slice %19 {offsets = [0, 1], sizes = [1, 128], strides = [1, 1]} : vector<1x130xf32> to vector<1x128xf32>
    %22 = arith.addf %20, %21 : vector<1x128xf32>
    %23 = vector.extract_strided_slice %19 {offsets = [0, 2], sizes = [1, 128], strides = [1, 1]} : vector<1x130xf32> to vector<1x128xf32>
    %24 = arith.addf %22, %23 : vector<1x128xf32>
    %cst_20 = arith.constant 0.000000e+00 : f32
    %25 = vector.broadcast %cst_20 : f32 to vector<1x128xf32>
    %26 = arith.cmpf oeq, %24, %25 : vector<1x128xf32>
    %cst_21 = arith.constant 1.000000e+00 : f32
    %27 = vector.broadcast %cst_21 : f32 to vector<1x128xf32>
    %28 = arith.select %26, %27, %24 : vector<1x128xi1>, vector<1x128xf32>
    %29 = tpu.reciprocal %28 : vector<1x128xf32> -> vector<1x128xf32>
    %30 = vector.broadcast %29 : vector<1x128xf32> to vector<8x128xf32>
    %31 = arith.mulf %13, %30 : vector<8x128xf32>
    %32 = vector.broadcast %1 : vector<8x1xf32> to vector<8x128xf32>
    %33 = arith.addf %31, %32 : vector<8x128xf32>
    %cst_22 = arith.constant 0.000000e+00 : f32
    %34 = vector.shape_cast %26 : vector<1x128xi1> to vector<1x128xi1>
    %35 = vector.broadcast %34 : vector<1x128xi1> to vector<8x128xi1>
    %36 = vector.broadcast %cst_22 : f32 to vector<8x128xf32>
    %37 = arith.select %35, %36, %33 : vector<8x128xi1>, vector<8x128xf32>
    %cst_23 = arith.constant 0.000000e+00 : f32
    %cst_24 = arith.constant 1.000000e+00 : f32
    %38 = vector.broadcast %cst_23 : f32 to vector<1x128xf32>
    %39 = vector.broadcast %cst_24 : f32 to vector<1x128xf32>
    %40 = arith.select %26, %38, %39 : vector<1x128xi1>, vector<1x128xf32>
    %41 = vector.extract_strided_slice %37 {offsets = [0, 0], sizes = [8, 14], strides = [1, 1]} : vector<8x128xf32> to vector<8x14xf32>
    %c0_25 = arith.constant 0 : index
    %c0_26 = arith.constant 0 : index
    %c0_27 = arith.constant 0 : index
    %42 = vector.load %arg5[%c0_25, %c0_26, %c0_27] : memref<1x8x14xf32, #tpu.memory_space<vmem>>, vector<1x8x14xf32>
    %43 = vector.shape_cast %42 : vector<1x8x14xf32> to vector<8x14xf32>
    %44 = vector.shape_cast %41 : vector<8x14xf32> to vector<1x8x14xf32>
    tpu.vector_store %arg5[%c0_25, %c0_26, %c0_27], %44 {strides = array<i32>} : memref<1x8x14xf32, #tpu.memory_space<vmem>>, vector<1x8x14xf32>,
    %45 = vector.extract_strided_slice %40 {offsets = [0, 0], sizes = [1, 14], strides = [1, 1]} : vector<1x128xf32> to vector<1x14xf32>
    %c0_28 = arith.constant 0 : index
    %c0_29 = arith.constant 0 : index
    %c0_30 = arith.constant 0 : index
    %46 = vector.load %arg6[%c0_28, %c0_29, %c0_30] : memref<1x1x14xf32, #tpu.memory_space<vmem>>, vector<1x1x14xf32>
    %47 = vector.shape_cast %46 : vector<1x1x14xf32> to vector<1x14xf32>
    %48 = vector.shape_cast %45 : vector<1x14xf32> to vector<1x1x14xf32>
    tpu.vector_store %arg6[%c0_28, %c0_29, %c0_30], %48 {strides = array<i32>} : memref<1x1x14xf32, #tpu.memory_space<vmem>>, vector<1x1x14xf32>,
    return
  }
  func.func @transform_0(%arg0: i32) -> (i32, i32, i32) {
    %c0_i32 = arith.constant 0 : i32
    %c0_i32_0 = arith.constant 0 : i32
    %c0_i32_1 = arith.constant 0 : i32
    return %arg0, %c0_i32, %c0_i32_0 : i32, i32, i32
  }
  func.func @transform_1(%arg0: i32) -> (i32, i32, i32) {
    %c0_i32 = arith.constant 0 : i32
    %c0_i32_0 = arith.constant 0 : i32
    %c0_i32_1 = arith.constant 0 : i32
    return %arg0, %c0_i32, %c0_i32_0 : i32, i32, i32
  }
  func.func @transform_2(%arg0: i32) -> (i32, i32) {
    %c0_i32 = arith.constant 0 : i32
    %c0_i32_0 = arith.constant 0 : i32
    %c0_i32_1 = arith.constant 0 : i32
    return %c0_i32, %c0_i32_0 : i32, i32
  }
  func.func @transform_3(%arg0: i32) -> (i32, i32) {
    %c0_i32 = arith.constant 0 : i32
    %c0_i32_0 = arith.constant 0 : i32
    %c0_i32_1 = arith.constant 0 : i32
    return %c0_i32, %c0_i32_0 : i32, i32
  }
  func.func @transform_4(%arg0: i32) -> (i32, i32, i32) {
    %c0_i32 = arith.constant 0 : i32
    %c0_i32_0 = arith.constant 0 : i32
    %c0_i32_1 = arith.constant 0 : i32
    return %arg0, %c0_i32, %c0_i32_0 : i32, i32, i32
  }
  func.func @transform_5(%arg0: i32) -> (i32, i32, i32) {
    %c0_i32 = arith.constant 0 : i32
    %c0_i32_0 = arith.constant 0 : i32
    %c0_i32_1 = arith.constant 0 : i32
    return %arg0, %c0_i32, %c0_i32_0 : i32, i32, i32
  }
}

</mosaic_0001>

<llo_original>
// kernel: tpu_custom_call.1
$region0: #{tpu_custom_call.1}
  #allocation0 [shape = 'u32[]', space=smem, size = 0x4, offset = 0x4, fixed_abs, tag = 'smem constant byte address 0x4 - core index']
  #allocation1 [shape = 'u32[72,128]{1,0:T(1,128)}', space=vmem, size = 0x9000, scoped, tag = 'internal scratch']
  #allocation2 [shape = 'f32[12,128]{1,0:T(8,128)}', space=vmem, size = 0x2000, scoped, tag = 'scratch operand']
  %s0 = inlined_call_operand.vmem [shape: f32[2,4,16], index: 0, kind: input, shape index: {}]
  %s1 = inlined_call_operand.hbm [shape: f32[2,4,16], index: 1, kind: input, shape index: {}]
  %s2 = inlined_call_operand.hbm [shape: f32[8,12], index: 2, kind: input, shape index: {}]
  %s3 = inlined_call_operand.vmem [shape: f32[8,1], index: 3, kind: input, shape index: {}]
  %s4 = inlined_call_operand.hbm [shape: f32[2,8,14], index: 4, kind: output, shape index: {0}]
  %s5 = inlined_call_operand.hbm [shape: f32[2,1,14], index: 5, kind: output, shape index: {1}]
  %6 = xla_tuple %s4, %s5
  %s7 = sld [smem:[#allocation0]]
  $region65: #{tpu_custom_call.1} parent=0
    _
  %s9 = ssub.s32 1, %s7
  %s10 = scalar_select 0, %s9, %s7
  $region1: #{tpu_custom_call.1} parent=0
    #allocation3 [shape = 'u8[4096]{0}', space=vmem, size = 0x1000, scoped, tag = 'input window, operand 1']
    #allocation4 [shape = 's32[2]{0}', space=sflag, size = 0x8, scoped, tag = 'scoped memory for tpu_custom_call.1']
    #allocation5 [shape = 's32[2]{0}', space=sflag, size = 0x8, scoped, tag = 'scoped memory for tpu_custom_call.1']
    #allocation6 [shape = 'u8[4096]{0}', space=vmem, size = 0x1000, scoped, tag = 'input window, operand 2, single buffered']
    #allocation7 [shape = 's32[1]{0}', space=sflag, size = 0x4, scoped, tag = 'scoped memory for tpu_custom_call.1']
    #allocation8 [shape = 'u8[8192]{0}', space=vmem, size = 0x2000, scoped, tag = 'output window, operand 0']
    #allocation9 [shape = 'u8[1024]{0}', space=vmem, size = 0x400, scoped, tag = 'output window, operand 1']
    #allocation10 [shape = 's32[2]{0}', space=sflag, size = 0x8, scoped, tag = 'scoped memory for tpu_custom_call.1']
    %11 = vsyncpa [#allocation4], 0
    %s12 = scalar_lea.sflag [#allocation4], 1
    %13 = vsyncpa %s12, 0
    %14 = vsyncpa [#allocation7], 0
    %15 = vsyncpa [#allocation5], 0
    %s16 = scalar_lea.sflag [#allocation5], 1
    %17 = vsyncpa %s16, 0
    %18 = vsyncpa [#allocation10], 0
    %s19 = scalar_lea.sflag [#allocation10], 1
    %20 = vsyncpa %s19, 0
    loop: start=0, step=1, limit=4
    $region2: #{tpu_custom_call.1} parent=1 // loop_pre_header
      _
    $region3: #{tpu_custom_call.1} parent=1 // loop_header
      %s22 = sphi 0, %s26
      %p23 = scmp.ge.s32.totalorder %s22, 4
      %s32 = sphi 0, %s34
      %s35 = sphi 0, %s32
      %s36 = sphi 0, %s35
      %s52 = sphi 0, %s36
      %s58 = sphi 0, %s60
      %s61 = sphi 0, %s58
      %s62 = sphi 0, %s61
      %s78 = sphi 0, %s62
      %s82 = sphi 0, %s82
      %s84 = sphi 0, %s82
      %s85 = sphi 0, %s84
      %s99 = sphi 0, %s85
      %s103 = sphi 0, %s103
      %s105 = sphi 0, %s103
      %s106 = sphi 0, %s105
      %s120 = sphi 0, %s106
      %s126 = sphi 0, %s128
      %s129 = sphi 0, %s126
      %s130 = sphi 0, %s129
      %s146 = sphi 0, %s130
      %s152 = sphi 0, %s154
      %s155 = sphi 0, %s152
      %s156 = sphi 0, %s155
      %s172 = sphi 0, %s156
    $region4: #{tpu_custom_call.1} parent=1 // loop_header_branch
      %25 = sbr.rel (%p23) target = $region8
    $region5: #{tpu_custom_call.1} parent=1 // loop_body
      %s27 = ssub.s32 %s22, 1
      %s28 = ssub.s32 %s22, 2
      %s29 = sadd.s32 %s22, 1
      %s30 = ssub.s32 %s22, %s29
      %p31 = scmp.eq.s32.totalorder %s30, 0
      %s33 = sadd.s32 %s32, 1
      %s34 = scalar_select %p31, %s32, %s33
      %p37 = pneg %p31
      %p38 = scmp.eq.s32.totalorder %s22, 1
      %p39 = por %p37, %p38
      %p40 = scmp.ne.s32.totalorder %s32, %s35
      %p41 = scmp.eq.s32.totalorder %s22, 0
      %p42 = por %p40, %p41
      %p43 = scmp.ne.s32.totalorder %s32, %s35
      %p44 = scmp.eq.s32.totalorder %s27, 1
      %p45 = por %p43, %p44
      %p46 = scmp.ne.s32.totalorder %s35, %s36
      %p47 = scmp.eq.s32.totalorder %s27, 0
      %p48 = por %p46, %p47
      %p49 = scmp.ne.s32.totalorder %s35, %s36
      %p50 = scmp.eq.s32.totalorder %s28, 1
      %p51 = por %p49, %p50
      %p53 = scmp.ne.s32.totalorder %s36, %s52
      %p54 = scmp.eq.s32.totalorder %s28, 0
      %p55 = por %p53, %p54
      %s56 = ssub.s32 %s22, %s29
      %p57 = scmp.eq.s32.totalorder %s56, 0
      %s59 = sadd.s32 %s58, 1
      %s60 = scalar_select %p57, %s58, %s59
      %p63 = pneg %p57
      %p64 = scmp.eq.s32.totalorder %s22, 1
      %p65 = por %p63, %p64
      %p66 = scmp.ne.s32.totalorder %s58, %s61
      %p67 = scmp.eq.s32.totalorder %s22, 0
      %p68 = por %p66, %p67
      %p69 = scmp.ne.s32.totalorder %s58, %s61
      %p70 = scmp.eq.s32.totalorder %s27, 1
      %p71 = por %p69, %p70
      %p72 = scmp.ne.s32.totalorder %s61, %s62
      %p73 = scmp.eq.s32.totalorder %s27, 0
      %p74 = por %p72, %p73
      %p75 = scmp.ne.s32.totalorder %s61, %s62
      %p76 = scmp.eq.s32.totalorder %s28, 1
      %p77 = por %p75, %p76
      %p79 = scmp.ne.s32.totalorder %s62, %s78
      %p80 = scmp.eq.s32.totalorder %s28, 0
      %p81 = por %p79, %p80
      %s83 = sadd.s32 %s82, 1
      %p86 = scmp.eq.s32.totalorder %s22, 1
      %p87 = scmp.ne.s32.totalorder %s82, %s84
      %p88 = scmp.eq.s32.totalorder %s22, 0
      %p89 = por %p87, %p88
      %p90 = scmp.ne.s32.totalorder %s82, %s84
      %p91 = scmp.eq.s32.totalorder %s27, 1
      %p92 = por %p90, %p91
      %p93 = scmp.ne.s32.totalorder %s84, %s85
      %p94 = scmp.eq.s32.totalorder %s27, 0
      %p95 = por %p93, %p94
      %p96 = scmp.ne.s32.totalorder %s84, %s85
      %p97 = scmp.eq.s32.totalorder %s28, 1
      %p98 = por %p96, %p97
      %p100 = scmp.ne.s32.totalorder %s85, %s99
      %p101 = scmp.eq.s32.totalorder %s28, 0
      %p102 = por %p100, %p101
      %s104 = sadd.s32 %s103, 1
      %p107 = scmp.eq.s32.totalorder %s22, 1
      %p108 = scmp.ne.s32.totalorder %s103, %s105
      %p109 = scmp.eq.s32.totalorder %s22, 0
      %p110 = por %p108, %p109
      %p111 = scmp.ne.s32.totalorder %s103, %s105
      %p112 = scmp.eq.s32.totalorder %s27, 1
      %p113 = por %p111, %p112
      %p114 = scmp.ne.s32.totalorder %s105, %s106
      %p115 = scmp.eq.s32.totalorder %s27, 0
      %p116 = por %p114, %p115
      %p117 = scmp.ne.s32.totalorder %s105, %s106
      %p118 = scmp.eq.s32.totalorder %s28, 1
      %p119 = por %p117, %p118
      %p121 = scmp.ne.s32.totalorder %s106, %s120
      %p122 = scmp.eq.s32.totalorder %s28, 0
      %p123 = por %p121, %p122
      %s124 = ssub.s32 %s22, %s29
      %p125 = scmp.eq.s32.totalorder %s124, 0
      %s127 = sadd.s32 %s126, 1
      %s128 = scalar_select %p125, %s126, %s127
      %p131 = pneg %p125
      %p132 = scmp.eq.s32.totalorder %s22, 1
      %p133 = por %p131, %p132
      %p134 = scmp.ne.s32.totalorder %s126, %s129
      %p135 = scmp.eq.s32.totalorder %s22, 0
      %p136 = por %p134, %p135
      %p137 = scmp.ne.s32.totalorder %s126, %s129
      %p138 = scmp.eq.s32.totalorder %s27, 1
      %p139 = por %p137, %p138
      %p140 = scmp.ne.s32.totalorder %s129, %s130
      %p141 = scmp.eq.s32.totalorder %s27, 0
      %p142 = por %p140, %p141
      %p143 = scmp.ne.s32.totalorder %s129, %s130
      %p144 = scmp.eq.s32.totalorder %s28, 1
      %p145 = por %p143, %p144
      %p147 = scmp.ne.s32.totalorder %s130, %s146
      %p148 = scmp.eq.s32.totalorder %s28, 0
      %p149 = por %p147, %p148
      %s150 = ssub.s32 %s22, %s29
      %p151 = scmp.eq.s32.totalorder %s150, 0
      %s153 = sadd.s32 %s152, 1
      %s154 = scalar_select %p151, %s152, %s153
      %p157 = pneg %p151
      %p158 = scmp.eq.s32.totalorder %s22, 1
      %p159 = por %p157, %p158
      %p160 = scmp.ne.s32.totalorder %s152, %s155
      %p161 = scmp.eq.s32.totalorder %s22, 0
      %p162 = por %p160, %p161
      %p163 = scmp.ne.s32.totalorder %s152, %s155
      %p164 = scmp.eq.s32.totalorder %s27, 1
      %p165 = por %p163, %p164
      %p166 = scmp.ne.s32.totalorder %s155, %s156
      %p167 = scmp.eq.s32.totalorder %s27, 0
      %p168 = por %p166, %p167
      %p169 = scmp.ne.s32.totalorder %s155, %s156
      %p170 = scmp.eq.s32.totalorder %s28, 1
      %p171 = por %p169, %p170
      %p173 = scmp.ne.s32.totalorder %s156, %s172
      %p174 = scmp.eq.s32.totalorder %s28, 0
      %p175 = por %p173, %p174
      %p176 = scmp.le.s32.totalorder 1, %s22
      %p177 = scmp.lt.s32.totalorder %s22, 3
      %p178 = pnand %p176, %p177
      %p179 = pneg %p178
      // Predicated region
      $region9: #{tpu_custom_call.1} parent=5 // pred_check
        _
      $region10: #{tpu_custom_call.1} parent=5 // pred_check_branch
        %181 = sbr.rel (%p178) target = $region12
      $region11: #{tpu_custom_call.1} parent=5 // pred_region
        %s182 = ssub.s32 %s22, 1
        // Predicated region
        $region13: #{tpu_custom_call.1} parent=11 // pred_check
          %p183 = pneg %p95
        $region14: #{tpu_custom_call.1} parent=11 // pred_check_branch
          %185 = sbr.rel (%p183) target = $region16
        $region15: #{tpu_custom_call.1} parent=11 // pred_region
          %187 = vsyncadd [#allocation7], 0
          %s189 = sshll.u32 %s2, 4
          %s190 = int_to_ptr.hbm [resolvable:$true] %s189
          %s191 = sshll.u32 [#allocation6], 4
          %s192 = int_to_ptr.vmem [resolvable:$true] %s191
          %194 = dma.hbm_to_vmem [thread:$0]  %s190, 128, %s192, [#allocation7]
        $region16: #{tpu_custom_call.1} parent=11 // pred_fallthru
          _
        // Predicated region
        $region17: #{tpu_custom_call.1} parent=11 // pred_check
          %p195 = pneg %p116
        $region18: #{tpu_custom_call.1} parent=11 // pred_check_branch
          %197 = sbr.rel (%p195) target = $region20
        $region19: #{tpu_custom_call.1} parent=11 // pred_region
          _
        $region20: #{tpu_custom_call.1} parent=11 // pred_fallthru
          _
      $region12: #{tpu_custom_call.1} parent=5 // pred_fallthru
        _
      %p198 = scmp.lt.s32.totalorder %s22, 2
      // Predicated region
      $region21: #{tpu_custom_call.1} parent=5 // pred_check
        %p199 = pneg %p198
      $region22: #{tpu_custom_call.1} parent=5 // pred_check_branch
        %201 = sbr.rel (%p199) target = $region24
      $region23: #{tpu_custom_call.1} parent=5 // pred_region
        // Predicated region
        $region25: #{tpu_custom_call.1} parent=23 // pred_check
          %p202 = pneg %p42
        $region26: #{tpu_custom_call.1} parent=23 // pred_check_branch
          %204 = sbr.rel (%p202) target = $region28
        $region27: #{tpu_custom_call.1} parent=23 // pred_region
          %p205 = scmp.lt.s32.totalorder %s22, 1
          %s206 = scalar_select %p205, %s22, 1
          %s207 = smul.addr %s206, 4
          %s208 = scalar_lea.vmem %s0, %s207
        $region28: #{tpu_custom_call.1} parent=23 // pred_fallthru
          _
        // Predicated region
        $region29: #{tpu_custom_call.1} parent=23 // pred_check
          %p209 = pneg %p68
        $region30: #{tpu_custom_call.1} parent=23 // pred_check_branch
          %211 = sbr.rel (%p209) target = $region32
        $region31: #{tpu_custom_call.1} parent=23 // pred_region
          %s212 = sand.u32 %s58, 1
          %s213 = scalar_lea.sflag [#allocation4], %s212
          %s214 = sand.u32 %s58, 1
          %s215 = smul.addr %s214, 4
          %s216 = scalar_lea.vmem [#allocation3], %s215
          %218 = vsyncadd %s213, 0
          %s219 = smul.addr %s22, 4
          %s220 = scalar_lea.hbm %s1, %s219
          %s222 = sshll.u32 %s220, 4
          %s223 = int_to_ptr.hbm [resolvable:$true] %s222
          %s224 = sshll.u32 %s216, 4
          %s225 = int_to_ptr.vmem [resolvable:$true] %s224
          %227 = dma.hbm_to_vmem [thread:$0]  %s223, 64, %s225, %s213
        $region32: #{tpu_custom_call.1} parent=23 // pred_fallthru
          _
      $region24: #{tpu_custom_call.1} parent=5 // pred_fallthru
        _
      %p228 = scmp.le.s32.totalorder 1, %s22
      %p229 = scmp.lt.s32.totalorder %s22, 3
      %p230 = pnand %p228, %p229
      %p231 = pneg %p230
      // Predicated region
      $region33: #{tpu_custom_call.1} parent=5 // pred_check
        _
      $region34: #{tpu_custom_call.1} parent=5 // pred_check_branch
        %233 = sbr.rel (%p230) target = $region36
      $region35: #{tpu_custom_call.1} parent=5 // pred_region
        %s234 = ssub.s32 %s22, 1
        %s235 = sand.u32 %s61, 1
        %s236 = scalar_lea.sflag [#allocation4], %s235
        %s237 = sand.u32 %s61, 1
        %s238 = smul.addr %s237, 4
        %s239 = scalar_lea.vmem [#allocation3], %s238
        // Predicated region
        $region37: #{tpu_custom_call.1} parent=35 // pred_check
          %p240 = pneg %p74
        $region38: #{tpu_custom_call.1} parent=35 // pred_check_branch
          %242 = sbr.rel (%p240) target = $region40
        $region39: #{tpu_custom_call.1} parent=35 // pred_region
          %244 = dma.done %s236, 64
        $region40: #{tpu_custom_call.1} parent=35 // pred_fallthru
          _
        // Predicated region
        $region41: #{tpu_custom_call.1} parent=35 // pred_check
          %p245 = pneg %p95
        $region42: #{tpu_custom_call.1} parent=35 // pred_check_branch
          %247 = sbr.rel (%p245) target = $region44
        $region43: #{tpu_custom_call.1} parent=35 // pred_region
          %249 = dma.done [#allocation7], 128
        $region44: #{tpu_custom_call.1} parent=35 // pred_fallthru
          _
        %p250 = scmp.lt.s32.totalorder %s27, 1
        %s251 = scalar_select %p250, %s27, 1
        %s252 = smul.addr %s251, 4
        %s253 = scalar_lea.vmem %s0, %s252
        %p254 = pneg %p48
        %p255 = pneg %p45
        %s256 = sand.u32 %s61, 1
        %s257 = scalar_lea.sflag [#allocation4], %s256
        %s258 = sand.u32 %s61, 1
        %s259 = smul.addr %s258, 4
        %s260 = scalar_lea.vmem [#allocation3], %s259
        %p261 = pneg %p74
        %p262 = pneg %p71
        %p263 = pneg %p95
        %p264 = pneg %p92
        %p265 = pneg %p116
        %p266 = pneg %p113
        %p267 = pneg %p142
        %p268 = pneg %p139
        %s269 = sand.u32 %s129, 1
        %s270 = scalar_lea.sflag [#allocation5], %s269
        %s271 = sand.u32 %s129, 1
        %s272 = smul.addr %s271, 8
        %s273 = scalar_lea.vmem [#allocation8], %s272
        %p274 = pneg %p168
        %p275 = pneg %p165
        %s276 = sand.u32 %s155, 1
        %s277 = scalar_lea.sflag [#allocation10], %s276
        %s278 = sand.u32 %s155, 1
        %s279 = scalar_lea.vmem [#allocation9], %s278
        %p280 = scmp.lt.s32.totalorder %s27, 1
        %s281 = scalar_select %p280, %s27, 1
        %s282 = smul.addr %s281, 4
        %s283 = scalar_lea.vmem %s0, %s282
        %v284 = vld [vmem:[#allocation6] sm:$0xff]
        %v285 = vld [vmem:[%s3] sm:$0xff]
        %v286 = vld [vmem:[%s283] sm:$0xf]
        %v287 = vld [vmem:[%s239] sm:$0xf]
        %v288 = vmul.f32 %v286, %v287
        %vm289 = vcmask 125952
        %290 = vst.msk [vmem:[#allocation2] sm:$0xf] %vm289, %v288
        %292 = vrot.lane.b32.xlu0 %v288, 127
        %v293 = vpop.permute.xlu0 %292
        %vm295 = vcmask 117760
        %296 = vst.msk [vmem:[#allocation2 + $0x4] sm:$0xf] %vm295, %v293
        %297 = vrot.lane.b32.xlu0 %v288, 126
        %v298 = vpop.permute.xlu0 %297
        %vm300 = vcmask 109568
        %301 = vst.msk [vmem:[#allocation2 + $0x8] sm:$0xf] %vm300, %v298
        %v302 = vld [vmem:[#allocation2] sm:$0xff]
        %v303 = vld [vmem:[#allocation2 + $0x8] sm:$0xf]
        %vm304 = vcmask 97280
        %v306 = vsel %vm304, %v284, 0
        %vm308 = vcmask 1043456
        %v310 = vsel %vm308, %v303, 0
        %312 = vmatpush.msra.mxu0 0.0
        %313 = vmatpush.msra.mxu0 0.0
        %314 = vmatpush.msra.mxu0 0.0
        %315 = vmatpush.msra.mxu0 0.0
        %316 = vmatpush.msra.mxu0 0.0
        %317 = vmatpush.msra.mxu0 0.0
        %318 = vmatpush.msra.mxu0 0.0
        %319 = vmatpush.msra.mxu0 0.0
        %320 = vmatpush.msra.mxu0 0.0
        %321 = vmatpush.msra.mxu0 0.0
        %322 = vmatpush.msra.mxu0 0.0
        %323 = vmatpush.msra.mxu0 0.0
        %324 = vmatpush.msra.mxu0 0.0
        %325 = vmatpush.msra.mxu0 0.0
        %326 = vmatpush.msra.mxu0 %v310
        %327 = vmatpush.msra.mxu0 %v302
        %328 = vmatmul.f32.gmra.mxu0 %v306
        %v329 = vpop.f32.mrf.mxu0
        %v330 = vadd.f32 0.0, %v329
        %331 = vdwg.mxu0
        %v332 = vld [vmem:[%s239] sm:$0xf]
        %v333 = vsel %vm289, %v332, 0.0
        %v334 = vrot.slane %v333, 4
        %v335 = vadd.f32 %v333, %v334
        %v336 = vrot.slane %v335, 2
        %v337 = vadd.f32 %v335, %v336
        %v338 = vrot.slane %v337, 1
        %v339 = vadd.f32 %v337, %v338
        %vm340 = vcmask 130048
        %v341 = vsel %vm340, %v339, 0.0
        %344 = vrot.lane.b32.xlu0 %v341, 127
        %v345 = vpop.permute.xlu0 %344
        %346 = vrot.lane.b32.xlu0 0.0, 127
        %v347 = vpop.permute.xlu0 %346
        %vm348 = vcmask 1039360
        %v349 = vsel %vm348, %v345, %v347
        %v351 = vadd.f32 %v341, %v349
        %352 = vrot.lane.b32.xlu0 %v341, 126
        %v353 = vpop.permute.xlu0 %352
        %354 = vrot.lane.b32.xlu0 0.0, 126
        %v355 = vpop.permute.xlu0 %354
        %vm356 = vcmask 1031168
        %v357 = vsel %vm356, %v353, %v355
        %v359 = vadd.f32 %v351, %v357
        %vm360 = vcmp.eq.f32.partialorder %v359, 0.0
        %v361 = vsel %vm360, 1.0, %v359
        %v362 = vrcp.pop %v361
        %v363 = vmul.f32 %v361, %v362
        %v364 = vsub.f32 1.0, %v363
        %v365 = vmul.f32 %v362, %v364
        %v366 = vadd.f32 %v362, %v365
        %vm367 = vweird.f32 %v361
        %vm368 = vweird.f32 %v362
        %vm369 = vmor %vm367, %vm368
        %v370 = vsel %vm369, %v362, %v366
        %v371 = vand.u32 2147483647, %v361
        %vm372 = vcmp.eq.f32.partialorder %v371, 8.507059e+37
        %v373 = vand.u32 %v361, 2147483648
        %v374 = vor.u32 1.1754944e-38, %v373
        %v375 = vsel %vm372, %v374, %v370
        %v376 = vperm.slane %v375, 0
        %v377 = vmul.f32 %v330, %v376
        %379 = vset.pattern.permute.xlu0 0
        %380 = vperm.xlu0 %379, %v285
        %v381 = vpop.permute.xlu0 %380
        %v383 = vadd.f32 %v377, %v381
        %v384 = vsel %vm360, 1, 0
        %v385 = vperm.slane %v384, 0
        %vm386 = vcmp.eq.s32.totalorder %v385, 1
        %v387 = vsel %vm386, 0.0, %v383
        %v388 = vsel %vm360, 0.0, 1.0
        %vm389 = vcmask 113664
        %390 = vst.msk [vmem:[%s273] sm:$0xff] %vm389, %v387
        %vm391 = vcmask 106496
        %392 = vst.msk [vmem:[%s279] sm:$0x1] %vm391, %v388
        %s393 = sand.u32 %s129, 1
        %s394 = scalar_lea.sflag [#allocation5], %s393
        %s395 = sand.u32 %s129, 1
        %s396 = smul.addr %s395, 8
        %s397 = scalar_lea.vmem [#allocation8], %s396
        %s398 = sand.u32 %s155, 1
        %s399 = scalar_lea.sflag [#allocation10], %s398
        %s400 = sand.u32 %s155, 1
        %s401 = scalar_lea.vmem [#allocation9], %s400
        // Predicated region
        $region45: #{tpu_custom_call.1} parent=35 // pred_check
          %p402 = pneg %p139
        $region46: #{tpu_custom_call.1} parent=35 // pred_check_branch
          %404 = sbr.rel (%p402) target = $region48
        $region47: #{tpu_custom_call.1} parent=35 // pred_region
          %406 = vsyncadd %s394, 0
          %s407 = smul.addr %s27, 8
          %s408 = scalar_lea.hbm %s4, %s407
          %s410 = sshll.u32 %s397, 4
          %s411 = int_to_ptr.vmem [resolvable:$true] %s410
          %s412 = sshll.u32 %s408, 4
          %s413 = int_to_ptr.hbm [resolvable:$true] %s412
          %415 = dma.vmem_to_hbm [thread:$0]  %s411, 128, %s413, %s394
        $region48: #{tpu_custom_call.1} parent=35 // pred_fallthru
          _
        // Predicated region
        $region49: #{tpu_custom_call.1} parent=35 // pred_check
          %p416 = pneg %p165
        $region50: #{tpu_custom_call.1} parent=35 // pred_check_branch
          %418 = sbr.rel (%p416) target = $region52
        $region51: #{tpu_custom_call.1} parent=35 // pred_region
          %420 = vsyncadd %s399, 0
          %s421 = scalar_lea.hbm %s5, %s27
          %s423 = sshll.u32 %s401, 4
          %s424 = int_to_ptr.vmem [resolvable:$true] %s423
          %s425 = sshll.u32 %s421, 4
          %s426 = int_to_ptr.hbm [resolvable:$true] %s425
          %428 = dma.vmem_to_hbm [thread:$0]  %s424, 16, %s426, %s399
        $region52: #{tpu_custom_call.1} parent=35 // pred_fallthru
          _
      $region36: #{tpu_custom_call.1} parent=5 // pred_fallthru
        _
      %p429 = scmp.le.s32.totalorder 2, %s22
      // Predicated region
      $region53: #{tpu_custom_call.1} parent=5 // pred_check
        %p430 = pneg %p429
      $region54: #{tpu_custom_call.1} parent=5 // pred_check_branch
        %432 = sbr.rel (%p430) target = $region56
      $region55: #{tpu_custom_call.1} parent=5 // pred_region
        %s433 = ssub.s32 %s22, 2
        // Predicated region
        $region57: #{tpu_custom_call.1} parent=55 // pred_check
          %p434 = pneg %p145
        $region58: #{tpu_custom_call.1} parent=55 // pred_check_branch
          %436 = sbr.rel (%p434) target = $region60
        $region59: #{tpu_custom_call.1} parent=55 // pred_region
          %s437 = sand.u32 %s130, 1
          %s438 = scalar_lea.sflag [#allocation5], %s437
          %s439 = sand.u32 %s130, 1
          %s440 = smul.addr %s439, 8
          %s441 = scalar_lea.vmem [#allocation8], %s440
          %443 = dma.done %s438, 128
        $region60: #{tpu_custom_call.1} parent=55 // pred_fallthru
          _
        // Predicated region
        $region61: #{tpu_custom_call.1} parent=55 // pred_check
          %p444 = pneg %p171
        $region62: #{tpu_custom_call.1} parent=55 // pred_check_branch
          %446 = sbr.rel (%p444) target = $region64
        $region63: #{tpu_custom_call.1} parent=55 // pred_region
          %s447 = sand.u32 %s156, 1
          %s448 = scalar_lea.sflag [#allocation10], %s447
          %s449 = sand.u32 %s156, 1
          %s450 = scalar_lea.vmem [#allocation9], %s449
          %452 = dma.done %s448, 16
        $region64: #{tpu_custom_call.1} parent=55 // pred_fallthru
          _
      $region56: #{tpu_custom_call.1} parent=5 // pred_fallthru
        _
    $region6: #{tpu_custom_call.1} parent=1 // loop_footer
      %s26 = sadd.s32 1, %s22
    $region7: #{tpu_custom_call.1} parent=1 // loop_footer_branch
      %21 = sbr.rel target = $region3
    $region8: #{tpu_custom_call.1} parent=1 // loop_exit
      _
    %453 = vsyncpa [#allocation4], 1
    %s454 = scalar_lea.sflag [#allocation4], 1
    %455 = vsyncpa %s454, 1
    %456 = vsyncpa [#allocation7], 1
    %457 = vsyncpa [#allocation5], 1
    %s458 = scalar_lea.sflag [#allocation5], 1
    %459 = vsyncpa %s458, 1
    %460 = vsyncpa [#allocation10], 1
    %s461 = scalar_lea.sflag [#allocation10], 1
    %462 = vsyncpa %s461, 1

</llo_original>
